<compile_context>
chip_gen: v7x
topology: tpu7x:2x2x1
jax: 0.10.0
libtpu: 0.0.40
codegen_flags: <defaults>
</compile_context>

<pallas_src>
import functools

import jax
import jax.numpy as jnp
from jax import lax
from jax.experimental import pallas as pl
from jax.experimental.pallas import tpu as pltpu


def _mask_out_kernel(x_ref, o_ref, *, tile_m):
    # x_ref / o_ref view: (TB, TM, S2) — TB batch elements x TM rows of the plane.
    x = x_ref[...]
    tb, tm, s2 = x.shape
    row_off = pl.program_id(1) * tile_m  # global row offset of this row tile
    rows = lax.broadcasted_iota(jnp.int32, (tb, tm, s2), dimension=1) + row_off
    cols = lax.broadcasted_iota(jnp.int32, (tb, tm, s2), dimension=2)
    # torch.tril(..., diagonal=-1): keep element iff row > col (strictly lower).
    keep = rows > cols
    # Multiply (not select) to exactly mirror `x * mask` semantics.
    o_ref[...] = x * keep.astype(x.dtype)


def _sublane_multiple(dtype):
    itemsize = jnp.dtype(dtype).itemsize
    return {4: 8, 2: 16, 1: 32}.get(itemsize, 8)


def _choose_tiles(B, S1, S2, dtype, target_bytes):
    """Pick (TB, TM) so one (TB, TM, S2) tile is ~target_bytes and layout-legal."""
    itemsize = jnp.dtype(dtype).itemsize
    sub = _sublane_multiple(dtype)
    plane_bytes = S1 * S2 * itemsize
    if plane_bytes <= target_bytes:
        # Whole (S1, S2) plane per batch element; pack several batch elements per tile.
        tm = S1
        tb = max(1, min(B, target_bytes // max(plane_bytes, 1)))
    else:
        # One batch element per tile; tile rows in multiples of the sublane quantum.
        tb = 1
        rows_fit = max(1, target_bytes // (S2 * itemsize))
        tm = max(sub, (rows_fit // sub) * sub)
        if tm >= S1:
            tm = S1
    return tb, tm


def mask_out(x, *, target_tile_bytes=2 * 1024 * 1024):
    """x: (B, S1, S2) -> x * strictly_lower_triangular_mask(S1, S2)."""
    B, S1, S2 = x.shape
    tb, tm = _choose_tiles(B, S1, S2, x.dtype, target_tile_bytes)
    grid = (pl.cdiv(B, tb), pl.cdiv(S1, tm))

    kernel = functools.partial(_mask_out_kernel, tile_m=tm)
    return pl.pallas_call(
        kernel,
        out_shape=jax.ShapeDtypeStruct((B, S1, S2), x.dtype),
        grid_spec=pltpu.PrefetchScalarGridSpec(
            num_scalar_prefetch=0,
            grid=grid,
            in_specs=[pl.BlockSpec((tb, tm, S2), lambda b, r: (b, r, 0))],
            out_specs=pl.BlockSpec((tb, tm, S2), lambda b, r: (b, r, 0)),
        ),
        compiler_params=pltpu.CompilerParams(
            # Both axes independent -> shardable across v7x's 2 TensorCores.
            dimension_semantics=("parallel", "parallel"),
            # 2 MiB tiles * (in + out) * double-buffer ~= 8 MiB, safely under this
            # on v5e/v6e (128 MiB physical) and v7x (64 MiB physical).
            vmem_limit_bytes=32 * 1024 * 1024,
        ),
    )(x)


def mask_out_ref(x):
    """Pure-JAX reference mirroring the PyTorch module."""
    s1, s2 = x.shape[1], x.shape[2]
    mask = jnp.tril(jnp.ones((s1, s2), dtype=x.dtype), k=-1)
    return x * mask


if __name__ == "__main__":
    key = jax.random.PRNGKey(0)

    # 1) Small shape consistent with the module's forward: (batch, rows, cols).
    B, S1, S2 = 2, 16, 16
    x = jax.random.normal(key, (B, S1, S2), dtype=jnp.float32)
    out = jax.block_until_ready(mask_out(x))
    ref = mask_out_ref(x)
    assert out.shape == ref.shape and out.dtype == ref.dtype
    assert jnp.allclose(out, ref), "mismatch vs reference (f32, single tile)"

    # 2) Exercise the multi-tile path (row tiling with global row offsets) by
    #    forcing a tiny per-tile byte budget.
    k2 = jax.random.PRNGKey(1)
    x2 = jax.random.normal(k2, (2, 48, 24), dtype=jnp.float32)
    out2 = jax.block_until_ready(mask_out(x2, target_tile_bytes=2048))
    assert jnp.allclose(out2, mask_out_ref(x2)), "mismatch vs reference (tiled rows)"

    # 3) bf16 path (sublane multiple = 16).
    k3 = jax.random.PRNGKey(2)
    x3 = jax.random.normal(k3, (2, 32, 16), dtype=jnp.bfloat16)
    out3 = jax.block_until_ready(mask_out(x3))
    assert jnp.allclose(out3.astype(jnp.float32),
                        mask_out_ref(x3).astype(jnp.float32)), "mismatch vs reference (bf16)"

    print("KERNEL_OK")
</pallas_src>

<mosaic_0001>
module attributes {stable_mosaic.version = 11 : i64} {
  func.func @_mask_out_kernel(%arg0: i32, %arg1: i32, %arg2: memref<2x16x16xf32, #tpu.memory_space<vmem>>, %arg3: memref<2x16x16xf32, #tpu.memory_space<vmem>>) attributes {dimension_semantics = [#tpu.dimension_semantics<parallel>, #tpu.dimension_semantics<parallel>], iteration_bounds = array<i64: 1, 1>, scalar_prefetch = 0 : i64, scratch_operands = 0 : i64, tpu.core_type = #tpu.core_type<tc>, window_params = [{transform_indices = @transform_0, window_bounds = array<i64: 2, 16, 16>}, {transform_indices = @transform_1, window_bounds = array<i64: 2, 16, 16>}]} {
    %c0 = arith.constant 0 : index
    %c0_0 = arith.constant 0 : index
    %c0_1 = arith.constant 0 : index
    %0 = vector.load %arg2[%c0, %c0_0, %c0_1] : memref<2x16x16xf32, #tpu.memory_space<vmem>>, vector<2x16x16xf32>
    %c16_i32 = arith.constant 16 : i32
    %1 = arith.muli %arg1, %c16_i32 : i32
    %2 = tpu.iota {dimensions = array<i32: 1>} : vector<2x16x16xi32>
    %3 = vector.broadcast %1 : i32 to vector<2x16x16xi32>
    %4 = arith.addi %2, %3 : vector<2x16x16xi32>
    %5 = tpu.iota {dimensions = array<i32: 2>} : vector<2x16x16xi32>
    %6 = arith.cmpi sgt, %4, %5 : vector<2x16x16xi32>
    %7 = arith.extui %6 : vector<2x16x16xi1> to vector<2x16x16xi32>
    %8 = arith.sitofp %7 : vector<2x16x16xi32> to vector<2x16x16xf32>
    %9 = arith.mulf %0, %8 : vector<2x16x16xf32>
    %c0_2 = arith.constant 0 : index
    %c0_3 = arith.constant 0 : index
    %c0_4 = arith.constant 0 : index
    %10 = vector.load %arg3[%c0_2, %c0_3, %c0_4] : memref<2x16x16xf32, #tpu.memory_space<vmem>>, vector<2x16x16xf32>
    tpu.vector_store %arg3[%c0_2, %c0_3, %c0_4], %9 {strides = array<i32>} : memref<2x16x16xf32, #tpu.memory_space<vmem>>, vector<2x16x16xf32>,
    return
  }
  func.func @transform_0(%arg0: i32, %arg1: i32) -> (i32, i32, i32) {
    %c0_i32 = arith.constant 0 : i32
    %c0_i32_0 = arith.constant 0 : i32
    return %arg0, %arg1, %c0_i32 : i32, i32, i32
  }
  func.func @transform_1(%arg0: i32, %arg1: i32) -> (i32, i32, i32) {
    %c0_i32 = arith.constant 0 : i32
    %c0_i32_0 = arith.constant 0 : i32
    return %arg0, %arg1, %c0_i32 : i32, i32, i32
  }
}

</mosaic_0001>

<llo_original>
// kernel: tpu_custom_call.1
$region0: #{tpu_custom_call.1}
  #allocation0 [shape = 'u32[]', space=smem, size = 0x4, offset = 0x4, fixed_abs, tag = 'smem constant byte address 0x4 - core index']
  #allocation1 [shape = 'u32[144,128]{1,0:T(1,128)}', space=vmem, size = 0x12000, scoped, tag = 'internal scratch']
  %s0 = inlined_call_operand.hbm [shape: f32[2,16,16], index: 0, kind: input, shape index: {}]
  %s1 = inlined_call_operand.hbm [shape: f32[2,16,16], index: 1, kind: output, shape index: {}]
  %s2 = sld [smem:[#allocation0]]
  $region18: #{tpu_custom_call.1} parent=0
    _
  %s4 = ssub.s32 1, %s2
  %s5 = scalar_select 0, %s4, %s2
  $region1: #{tpu_custom_call.1} parent=0
    #allocation2 [shape = 'u8[16384]{0}', space=vmem, size = 0x4000, scoped, tag = 'input window, operand 0, single buffered']
    #allocation3 [shape = 's32[1]{0}', space=sflag, size = 0x4, scoped, tag = 'scoped memory for tpu_custom_call.1']
    #allocation4 [shape = 's32[1]{0}', space=sflag, size = 0x4, scoped, tag = 'scoped memory for tpu_custom_call.1']
    #allocation5 [shape = 'u8[16384]{0}', space=vmem, size = 0x4000, scoped, tag = 'output window, operand 0, single buffered']
    %6 = vsyncpa [#allocation3], 0
    %7 = vsyncpa [#allocation4], 0
    // Predicated region
    $region2: #{tpu_custom_call.1} parent=1 // pred_check
      _
    $region3: #{tpu_custom_call.1} parent=1 // pred_check_branch
      %9 = sbr.rel (0) target = $region5
    $region4: #{tpu_custom_call.1} parent=1 // pred_region
      %s11 = ssub.s32 512, 512
      %12 = vsyncadd [#allocation3], %s11
      %s13 = sshll.u32 [#allocation2], 4
      %s14 = int_to_ptr.vmem [resolvable:$true] %s13
      %19 = dma.hbm_to_vmem [thread:$0]  %s0, 512, %s14, [#allocation3], 128, 128, 8
    $region5: #{tpu_custom_call.1} parent=1 // pred_fallthru
      _
    // Predicated region
    $region6: #{tpu_custom_call.1} parent=1 // pred_check
      _
    $region7: #{tpu_custom_call.1} parent=1 // pred_check_branch
      %21 = sbr.rel (0) target = $region9
    $region8: #{tpu_custom_call.1} parent=1 // pred_region
      %22 = dma.done [#allocation3], 512
    $region9: #{tpu_custom_call.1} parent=1 // pred_fallthru
      _
    %v23 = vld [vmem:[#allocation2] sm:$0xff]
    %v24 = vld [vmem:[#allocation2 + $0x8] sm:$0xff]
    %v25 = vld [vmem:[#allocation2 + $0x10] sm:$0xff]
    %v26 = vld [vmem:[#allocation2 + $0x18] sm:$0xff]
    %s27 = smul.u32 0, 16
    %v28 = vlaneseq
    %v29 = vshrl.u32 %v28, 7
    %v30 = vadd.s32 %v29, 8
    %v31 = vstv %s27
    %v32 = vadd.s32 %v29, %v31
    %v33 = vadd.s32 %v30, %v31
    %v34 = vlaneseq
    %v35 = vand.u32 %v34, 127
    %vm36 = vcmp.gt.s32.totalorder %v32, %v35
    %vm37 = vcmp.gt.s32.totalorder %v33, %v35
    %v38 = vsel %vm36, 1, 0
    %v39 = vsel %vm37, 1, 0
    %v40 = vcvt.s32.f32 %v38
    %v41 = vcvt.s32.f32 %v39
    %v42 = vmul.f32 %v23, %v40
    %v43 = vmul.f32 %v24, %v41
    %v44 = vmul.f32 %v25, %v40
    %v45 = vmul.f32 %v26, %v41
    %vm46 = vcmask 130048
    %47 = vst.msk [vmem:[#allocation5] sm:$0xff] %vm46, %v42
    %48 = vst.msk [vmem:[#allocation5 + $0x8] sm:$0xff] %vm46, %v43
    %49 = vst.msk [vmem:[#allocation5 + $0x10] sm:$0xff] %vm46, %v44
    %50 = vst.msk [vmem:[#allocation5 + $0x18] sm:$0xff] %vm46, %v45
    // Predicated region
    $region10: #{tpu_custom_call.1} parent=1 // pred_check
      _
    $region11: #{tpu_custom_call.1} parent=1 // pred_check_branch
      %52 = sbr.rel (0) target = $region13
    $region12: #{tpu_custom_call.1} parent=1 // pred_region
      %s54 = ssub.s32 512, 512
      %55 = vsyncadd [#allocation4], %s54
      %s56 = sshll.u32 [#allocation5], 4
      %s57 = int_to_ptr.vmem [resolvable:$true] %s56
      %62 = dma.vmem_to_hbm [thread:$0]  %s57, 512, %s1, [#allocation4], 128, 128, 8
    $region13: #{tpu_custom_call.1} parent=1 // pred_fallthru
      _
    // Predicated region
    $region14: #{tpu_custom_call.1} parent=1 // pred_check
      _
    $region15: #{tpu_custom_call.1} parent=1 // pred_check_branch
      %64 = sbr.rel (0) target = $region17
    $region16: #{tpu_custom_call.1} parent=1 // pred_region
      %65 = dma.done [#allocation4], 512
    $region17: #{tpu_custom_call.1} parent=1 // pred_fallthru
      _
    %66 = vsyncpa [#allocation3], 1
    %67 = vsyncpa [#allocation4], 1

</llo_original>
